<compile_context>
chip_gen: v7x
topology: tpu7x:2x2x1
jax: 0.10.0
libtpu: 0.0.40
codegen_flags: <defaults>
</compile_context>

<pallas_src>
import functools

import jax
import jax.numpy as jnp
from jax import lax
from jax.experimental import pallas as pl
from jax.experimental.pallas import tpu as pltpu


def _group_norm_mask_kernel(x_ref, mask_ref, w_ref, b_ref, o_ref, *, eps):
    """One grid step == Bt batch rows of one channel group.

    x_ref    : (Bt, 1, Cg, Lp)  input tile
    mask_ref : (Bt, 1, 1,  Lp)  mask tile (broadcasts over channels)
    w_ref    : (1,  1, Cg, 1 )  per-channel scale for this group
    b_ref    : (1,  1, Cg, 1 )  per-channel shift for this group
    o_ref    : (Bt, 1, Cg, Lp)  output tile
    """
    cg = x_ref.shape[2]

    # Keep all statistics in f32 even for bf16 I/O (v5e has no bf16 VPU).
    x = x_ref[...].astype(jnp.float32)        # (Bt, 1, Cg, Lp)
    m = mask_ref[...].astype(jnp.float32)     # (Bt, 1, 1,  Lp)

    # x = x * mask
    xm = x * m

    # Per-(batch-row, group) statistics. Note: two-pass diff^2 form is kept
    # (not E[x^2]-E[x]^2) so semantics match PyTorch exactly for any mask
    # (not just binary). If mask.sum()==0 this produces NaN, same as PyTorch.
    msum = jnp.sum(m, axis=3, keepdims=True)                      # (Bt,1,1,1)
    inv_denom = 1.0 / (cg * msum)                                 # (Bt,1,1,1)
    mean = jnp.sum(xm, axis=(2, 3), keepdims=True) * inv_denom    # (Bt,1,1,1)
    diff = xm - mean
    var = jnp.sum(diff * diff * m, axis=(2, 3), keepdims=True) * inv_denom
    rstd = lax.rsqrt(var + eps)                                   # (Bt,1,1,1)

    # Strength-reduced epilogue: out = ((xm - mean) * rstd) * w + b
    #                                = xm * (w*rstd) + (b - mean*(w*rstd))
    w = w_ref[...].astype(jnp.float32)        # (1,1,Cg,1)
    b = b_ref[...].astype(jnp.float32)        # (1,1,Cg,1)
    scale = w * rstd                          # (Bt,1,Cg,1)
    shift = b - mean * scale                  # (Bt,1,Cg,1)

    o_ref[...] = (xm * scale + shift).astype(o_ref.dtype)


def group_norm_mask(x, mask, weight, bias, *, num_groups, eps=1e-5):
    """x: (B, C, L), mask: (B, L), weight/bias: (C,). Returns (B, C, L)."""
    B, C, L = x.shape
    assert C % num_groups == 0
    G = num_groups
    Cg = C // G

    # Pad the lane axis L to a multiple of 128: lane-dense loads/stores
    # (no masked vst) and aligned DMA tiles. Padded mask entries are zero so
    # the statistics are unaffected; padded output columns are sliced off.
    Lp = ((L + 127) // 128) * 128
    if Lp != L:
        x = jnp.pad(x, ((0, 0), (0, 0), (0, Lp - L)))
        mask = jnp.pad(mask, ((0, 0), (0, Lp - L)))

    xg = x.reshape(B, G, Cg, Lp)
    mg = mask.reshape(B, 1, 1, Lp).astype(jnp.float32)
    wg = weight.reshape(1, G, Cg, 1)
    bg = bias.reshape(1, G, Cg, 1)

    # Fold batch rows per grid step so each x block is up to ~2 MiB of f32:
    # big enough to amortize the ~0.35 us per-step overhead and reach the
    # high-bandwidth DMA regime, small enough that double-buffered in+out
    # (~4x the block) fits the default scoped-VMEM limit on every generation
    # (v5e 16 MiB, v6e 32 MiB, v7x 32 of 64 MiB) with no vmem_limit override.
    budget_elems = 512 * 1024                 # f32 elements per x block
    per_row = Cg * Lp
    max_bt = max(1, budget_elems // per_row)
    Bt = 1
    for d in range(1, B + 1):
        if B % d == 0 and d <= max_bt:
            Bt = d
    # TODO(synk): for extreme L where even (1,1,Cg,Lp) exceeds VMEM, a second
    # reduction grid axis over L (marked "arbitrary") would be needed.

    kernel = functools.partial(_group_norm_mask_kernel, eps=eps)

    out = pl.pallas_call(
        kernel,
        out_shape=jax.ShapeDtypeStruct((B, G, Cg, Lp), x.dtype),
        grid_spec=pltpu.PrefetchScalarGridSpec(
            num_scalar_prefetch=0,
            grid=(B // Bt, G),
            in_specs=[
                pl.BlockSpec((Bt, 1, Cg, Lp), lambda b, g: (b, g, 0, 0)),  # x
                pl.BlockSpec((Bt, 1, 1, Lp), lambda b, g: (b, 0, 0, 0)),   # mask
                pl.BlockSpec((1, 1, Cg, 1), lambda b, g: (0, g, 0, 0)),    # weight
                pl.BlockSpec((1, 1, Cg, 1), lambda b, g: (0, g, 0, 0)),    # bias
            ],
            out_specs=pl.BlockSpec((Bt, 1, Cg, Lp), lambda b, g: (b, g, 0, 0)),
        ),
        compiler_params=pltpu.CompilerParams(
            dimension_semantics=("parallel", "parallel")),
    )(xg, mg, wg, bg)

    out = out.reshape(B, C, Lp)
    if Lp != L:
        out = out[:, :, :L]
    return out


def _reference(x, mask, weight, bias, *, num_groups, eps=1e-5):
    """Pure-JAX transcription of the PyTorch forward, for verification."""
    B, C, L = x.shape
    G = num_groups
    Cg = C // G
    xg = x.reshape(B, G, Cg, L)
    m = mask.reshape(B, 1, 1, L)
    xg = xg * m
    msum = m.sum(axis=3, keepdims=True)
    mean = xg.mean(axis=2, keepdims=True).sum(axis=3, keepdims=True) / msum
    var = (((xg - mean) ** 2) * m).mean(axis=2, keepdims=True).sum(
        axis=3, keepdims=True) / msum
    xn = (xg - mean) / jnp.sqrt(var + eps)
    xn = xn.reshape(B, C, L)
    return xn * weight.reshape(1, -1, 1) + bias.reshape(1, -1, 1)


if __name__ == "__main__":
    key = jax.random.PRNGKey(0)
    kx, km, kw, kb = jax.random.split(key, 4)

    B, C, L = 2, 4, 16
    num_groups = 2

    x = jax.random.normal(kx, (B, C, L), dtype=jnp.float32)
    # binary-ish mask with at least one active position per row
    mask = (jax.random.uniform(km, (B, L)) > 0.3).astype(jnp.float32)
    mask = mask.at[:, 0].set(1.0)

    # 1) Module defaults (reset_parameters): weight=ones(C), bias=zeros(C).
    weight = jnp.ones((C,), dtype=jnp.float32)
    bias = jnp.zeros((C,), dtype=jnp.float32)
    out = group_norm_mask(x, mask, weight, bias, num_groups=num_groups)
    out = jax.block_until_ready(out)
    ref = _reference(x, mask, weight, bias, num_groups=num_groups)
    assert out.shape == (B, C, L)
    assert jnp.allclose(out, ref, atol=1e-4, rtol=1e-4), (
        f"max err {jnp.max(jnp.abs(out - ref))}")

    # 2) Non-trivial affine parameters (exercise the fused scale/shift path).
    weight2 = jax.random.normal(kw, (C,), dtype=jnp.float32)
    bias2 = jax.random.normal(kb, (C,), dtype=jnp.float32)
    out2 = group_norm_mask(x, mask, weight2, bias2, num_groups=num_groups)
    out2 = jax.block_until_ready(out2)
    ref2 = _reference(x, mask, weight2, bias2, num_groups=num_groups)
    assert jnp.allclose(out2, ref2, atol=1e-4, rtol=1e-4), (
        f"max err {jnp.max(jnp.abs(out2 - ref2))}")

    print("KERNEL_OK")
</pallas_src>

<mosaic_0001>
module attributes {stable_mosaic.version = 11 : i64} {
  func.func @_group_norm_mask_kernel(%arg0: i32, %arg1: i32, %arg2: memref<2x1x2x128xf32, #tpu.memory_space<vmem>>, %arg3: memref<2x1x1x128xf32, #tpu.memory_space<vmem>>, %arg4: memref<1x1x2x1xf32, #tpu.memory_space<vmem>>, %arg5: memref<1x1x2x1xf32, #tpu.memory_space<vmem>>, %arg6: memref<2x1x2x128xf32, #tpu.memory_space<vmem>>) attributes {dimension_semantics = [#tpu.dimension_semantics<parallel>, #tpu.dimension_semantics<parallel>], iteration_bounds = array<i64: 1, 2>, scalar_prefetch = 0 : i64, scratch_operands = 0 : i64, tpu.core_type = #tpu.core_type<tc>, window_params = [{transform_indices = @transform_0, window_bounds = array<i64: 2, 1, 2, 128>}, {transform_indices = @transform_1, window_bounds = array<i64: 2, 1, 1, 128>}, {transform_indices = @transform_2, window_bounds = array<i64: 1, 1, 2, 1>}, {transform_indices = @transform_3, window_bounds = array<i64: 1, 1, 2, 1>}, {transform_indices = @transform_4, window_bounds = array<i64: 2, 1, 2, 128>}]} {
    %c0 = arith.constant 0 : index
    %c0_0 = arith.constant 0 : index
    %c0_1 = arith.constant 0 : index
    %c0_2 = arith.constant 0 : index
    %0 = vector.load %arg2[%c0, %c0_0, %c0_1, %c0_2] : memref<2x1x2x128xf32, #tpu.memory_space<vmem>>, vector<2x1x2x128xf32>
    %c0_3 = arith.constant 0 : index
    %c0_4 = arith.constant 0 : index
    %c0_5 = arith.constant 0 : index
    %c0_6 = arith.constant 0 : index
    %1 = vector.load %arg3[%c0_3, %c0_4, %c0_5, %c0_6] : memref<2x1x1x128xf32, #tpu.memory_space<vmem>>, vector<2x1x1x128xf32>
    %2 = vector.broadcast %1 : vector<2x1x1x128xf32> to vector<2x1x2x128xf32>
    %3 = arith.mulf %0, %2 : vector<2x1x2x128xf32>
    %cst = arith.constant dense<0.000000e+00> : vector<2x1x1xf32>
    %4 = vector.multi_reduction <add>, %1, %cst [3] : vector<2x1x1x128xf32> to vector<2x1x1xf32>
    %5 = vector.shape_cast %4 : vector<2x1x1xf32> to vector<2x1x1x1xf32>
    %cst_7 = arith.constant 2.000000e+00 : f32
    %6 = vector.broadcast %cst_7 : f32 to vector<2x1x1x1xf32>
    %7 = arith.mulf %6, %5 : vector<2x1x1x1xf32>
    %cst_8 = arith.constant 1.000000e+00 : f32
    %8 = vector.broadcast %cst_8 : f32 to vector<2x1x1x1xf32>
    %9 = arith.divf %8, %7 : vector<2x1x1x1xf32>
    %cst_9 = arith.constant dense<0.000000e+00> : vector<2x1xf32>
    %10 = vector.multi_reduction <add>, %3, %cst_9 [2, 3] : vector<2x1x2x128xf32> to vector<2x1xf32>
    %11 = vector.shape_cast %10 : vector<2x1xf32> to vector<2x1x1x1xf32>
    %12 = arith.mulf %11, %9 : vector<2x1x1x1xf32>
    %13 = vector.broadcast %12 : vector<2x1x1x1xf32> to vector<2x1x2x128xf32>
    %14 = arith.subf %3, %13 : vector<2x1x2x128xf32>
    %15 = arith.mulf %14, %14 : vector<2x1x2x128xf32>
    %16 = vector.broadcast %1 : vector<2x1x1x128xf32> to vector<2x1x2x128xf32>
    %17 = arith.mulf %15, %16 : vector<2x1x2x128xf32>
    %cst_10 = arith.constant dense<0.000000e+00> : vector<2x1xf32>
    %18 = vector.multi_reduction <add>, %17, %cst_10 [2, 3] : vector<2x1x2x128xf32> to vector<2x1xf32>
    %19 = vector.shape_cast %18 : vector<2x1xf32> to vector<2x1x1x1xf32>
    %20 = arith.mulf %19, %9 : vector<2x1x1x1xf32>
    %cst_11 = arith.constant 9.99999974E-6 : f32
    %21 = vector.broadcast %cst_11 : f32 to vector<2x1x1x1xf32>
    %22 = arith.addf %20, %21 : vector<2x1x1x1xf32>
    %23 = math.rsqrt %22 : vector<2x1x1x1xf32>
    %c0_12 = arith.constant 0 : index
    %c0_13 = arith.constant 0 : index
    %c0_14 = arith.constant 0 : index
    %c0_15 = arith.constant 0 : index
    %24 = vector.load %arg4[%c0_12, %c0_13, %c0_14, %c0_15] : memref<1x1x2x1xf32, #tpu.memory_space<vmem>>, vector<1x1x2x1xf32>
    %c0_16 = arith.constant 0 : index
    %c0_17 = arith.constant 0 : index
    %c0_18 = arith.constant 0 : index
    %c0_19 = arith.constant 0 : index
    %25 = vector.load %arg5[%c0_16, %c0_17, %c0_18, %c0_19] : memref<1x1x2x1xf32, #tpu.memory_space<vmem>>, vector<1x1x2x1xf32>
    %26 = vector.broadcast %24 : vector<1x1x2x1xf32> to vector<2x1x2x1xf32>
    %27 = vector.broadcast %23 : vector<2x1x1x1xf32> to vector<2x1x2x1xf32>
    %28 = arith.mulf %26, %27 : vector<2x1x2x1xf32>
    %29 = vector.broadcast %12 : vector<2x1x1x1xf32> to vector<2x1x2x1xf32>
    %30 = arith.mulf %29, %28 : vector<2x1x2x1xf32>
    %31 = vector.broadcast %25 : vector<1x1x2x1xf32> to vector<2x1x2x1xf32>
    %32 = arith.subf %31, %30 : vector<2x1x2x1xf32>
    %33 = vector.broadcast %28 : vector<2x1x2x1xf32> to vector<2x1x2x128xf32>
    %34 = arith.mulf %3, %33 : vector<2x1x2x128xf32>
    %35 = vector.broadcast %32 : vector<2x1x2x1xf32> to vector<2x1x2x128xf32>
    %36 = arith.addf %34, %35 : vector<2x1x2x128xf32>
    %c0_20 = arith.constant 0 : index
    %c0_21 = arith.constant 0 : index
    %c0_22 = arith.constant 0 : index
    %c0_23 = arith.constant 0 : index
    %37 = vector.load %arg6[%c0_20, %c0_21, %c0_22, %c0_23] : memref<2x1x2x128xf32, #tpu.memory_space<vmem>>, vector<2x1x2x128xf32>
    tpu.vector_store %arg6[%c0_20, %c0_21, %c0_22, %c0_23], %36 {strides = array<i32>} : memref<2x1x2x128xf32, #tpu.memory_space<vmem>>, vector<2x1x2x128xf32>,
    return
  }
  func.func @transform_0(%arg0: i32, %arg1: i32) -> (i32, i32, i32, i32) {
    %c0_i32 = arith.constant 0 : i32
    %c0_i32_0 = arith.constant 0 : i32
    %c0_i32_1 = arith.constant 0 : i32
    return %arg0, %arg1, %c0_i32, %c0_i32_0 : i32, i32, i32, i32
  }
  func.func @transform_1(%arg0: i32, %arg1: i32) -> (i32, i32, i32, i32) {
    %c0_i32 = arith.constant 0 : i32
    %c0_i32_0 = arith.constant 0 : i32
    %c0_i32_1 = arith.constant 0 : i32
    %c0_i32_2 = arith.constant 0 : i32
    return %arg0, %c0_i32, %c0_i32_0, %c0_i32_1 : i32, i32, i32, i32
  }
  func.func @transform_2(%arg0: i32, %arg1: i32) -> (i32, i32, i32, i32) {
    %c0_i32 = arith.constant 0 : i32
    %c0_i32_0 = arith.constant 0 : i32
    %c0_i32_1 = arith.constant 0 : i32
    %c0_i32_2 = arith.constant 0 : i32
    return %c0_i32, %arg1, %c0_i32_0, %c0_i32_1 : i32, i32, i32, i32
  }
  func.func @transform_3(%arg0: i32, %arg1: i32) -> (i32, i32, i32, i32) {
    %c0_i32 = arith.constant 0 : i32
    %c0_i32_0 = arith.constant 0 : i32
    %c0_i32_1 = arith.constant 0 : i32
    %c0_i32_2 = arith.constant 0 : i32
    return %c0_i32, %arg1, %c0_i32_0, %c0_i32_1 : i32, i32, i32, i32
  }
  func.func @transform_4(%arg0: i32, %arg1: i32) -> (i32, i32, i32, i32) {
    %c0_i32 = arith.constant 0 : i32
    %c0_i32_0 = arith.constant 0 : i32
    %c0_i32_1 = arith.constant 0 : i32
    return %arg0, %arg1, %c0_i32, %c0_i32_0 : i32, i32, i32, i32
  }
}

</mosaic_0001>

<llo_original>
// kernel: tpu_custom_call.1
$region0: #{tpu_custom_call.1}
  #allocation0 [shape = 'u32[]', space=smem, size = 0x4, offset = 0x4, fixed_abs, tag = 'smem constant byte address 0x4 - core index']
  #allocation1 [shape = 'u32[144,128]{1,0:T(1,128)}', space=vmem, size = 0x12000, scoped, tag = 'internal scratch']
  %s0 = inlined_call_operand.vmem [shape: f32[2,2,2,128], index: 0, kind: input, shape index: {}]
  %s1 = inlined_call_operand.vmem [shape: f32[2,1,1,128], index: 1, kind: input, shape index: {}]
  %s2 = inlined_call_operand.vmem [shape: f32[1,2,2,1], index: 2, kind: input, shape index: {}]
  %s3 = inlined_call_operand.vmem [shape: f32[1,2,2,1], index: 3, kind: input, shape index: {}]
  %s4 = inlined_call_operand.hbm [shape: f32[2,2,2,128], index: 4, kind: output, shape index: {}]
  %s5 = sld [smem:[#allocation0]]
  $region83: #{tpu_custom_call.1} parent=0
    _
  %s7 = ssub.s32 1, %s5
  %s8 = scalar_select 0, %s7, %s5
  $region1: #{tpu_custom_call.1} parent=0
    #allocation2 [shape = 'u8[4096]{0}', space=vmem, size = 0x1000, scoped, tag = 'input window, operand 0']
    #allocation3 [shape = 'u8[4096]{0}', space=vmem, size = 0x1000, scoped, tag = 'output window, operand 0']
    #allocation4 [shape = 's32[2]{0}', space=sflag, size = 0x8, scoped, tag = 'scoped memory for tpu_custom_call.1']
    %9 = vsyncpa [#allocation4], 0
    %s10 = scalar_lea.sflag [#allocation4], 1
    %11 = vsyncpa %s10, 0
    loop: start=0, step=1, limit=4
    $region2: #{tpu_custom_call.1} parent=1 // loop_pre_header
      _
    $region3: #{tpu_custom_call.1} parent=1 // loop_header
      %s13 = sphi 0, %s17
      %p14 = scmp.ge.s32.totalorder %s13, 4
      %s20 = sphi 0, %s32
      %s21 = sphi 0, %s28
      %s22 = sphi 0, %s20
      %s23 = sphi 0, %s21
      %s24 = sphi 0, %s22
      %s25 = sphi 0, %s23
      %s37 = sphi 0, %s39
      %s40 = sphi 0, %s37
      %s41 = sphi 0, %s40
      %s57 = sphi 0, %s41
      %s63 = sphi 0, %s65
      %s66 = sphi 0, %s63
      %s67 = sphi 0, %s66
      %s83 = sphi 0, %s67
      %s89 = sphi 0, %s91
      %s92 = sphi 0, %s89
      %s93 = sphi 0, %s92
      %s109 = sphi 0, %s93
      %s115 = sphi 0, %s117
      %s118 = sphi 0, %s115
      %s119 = sphi 0, %s118
      %s135 = sphi 0, %s119
      %s143 = sphi 0, %s145
      %s146 = sphi 0, %s143
      %s147 = sphi 0, %s146
      %s163 = sphi 0, %s147
    $region4: #{tpu_custom_call.1} parent=1 // loop_header_branch
      %16 = sbr.rel (%p14) target = $region8
    $region5: #{tpu_custom_call.1} parent=1 // loop_body
      %s18 = ssub.s32 %s13, 1
      %s19 = ssub.s32 %s13, 2
      %s26 = sadd.s32 1, %s21
      %p27 = scmp.ge.s32.totalorder %s26, 2
      %s28 = scalar_select %p27, 0, %s26
      %s29 = sadd.s32 1, %s20
      %s30 = scalar_select %p27, %s29, %s20
      %p31 = scmp.ge.s32.totalorder %s30, 1
      %s32 = scalar_select %p31, 0, %s30
      %s33 = ssub.s32 %s20, %s32
      %s34 = ssub.s32 %s21, %s28
      %s35 = sor.u32 %s33, %s34
      %p36 = scmp.eq.s32.totalorder %s35, 0
      %s38 = sadd.s32 %s37, 1
      %s39 = scalar_select %p36, %s37, %s38
      %p42 = pneg %p36
      %p43 = scmp.eq.s32.totalorder %s13, 1
      %p44 = por %p42, %p43
      %p45 = scmp.ne.s32.totalorder %s37, %s40
      %p46 = scmp.eq.s32.totalorder %s13, 0
      %p47 = por %p45, %p46
      %p48 = scmp.ne.s32.totalorder %s37, %s40
      %p49 = scmp.eq.s32.totalorder %s18, 1
      %p50 = por %p48, %p49
      %p51 = scmp.ne.s32.totalorder %s40, %s41
      %p52 = scmp.eq.s32.totalorder %s18, 0
      %p53 = por %p51, %p52
      %p54 = scmp.ne.s32.totalorder %s40, %s41
      %p55 = scmp.eq.s32.totalorder %s19, 1
      %p56 = por %p54, %p55
      %p58 = scmp.ne.s32.totalorder %s41, %s57
      %p59 = scmp.eq.s32.totalorder %s19, 0
      %p60 = por %p58, %p59
      %s61 = ssub.s32 %s20, %s32
      %p62 = scmp.eq.s32.totalorder %s61, 0
      %s64 = sadd.s32 %s63, 1
      %s65 = scalar_select %p62, %s63, %s64
      %p68 = pneg %p62
      %p69 = scmp.eq.s32.totalorder %s13, 1
      %p70 = por %p68, %p69
      %p71 = scmp.ne.s32.totalorder %s63, %s66
      %p72 = scmp.eq.s32.totalorder %s13, 0
      %p73 = por %p71, %p72
      %p74 = scmp.ne.s32.totalorder %s63, %s66
      %p75 = scmp.eq.s32.totalorder %s18, 1
      %p76 = por %p74, %p75
      %p77 = scmp.ne.s32.totalorder %s66, %s67
      %p78 = scmp.eq.s32.totalorder %s18, 0
      %p79 = por %p77, %p78
      %p80 = scmp.ne.s32.totalorder %s66, %s67
      %p81 = scmp.eq.s32.totalorder %s19, 1
      %p82 = por %p80, %p81
      %p84 = scmp.ne.s32.totalorder %s67, %s83
      %p85 = scmp.eq.s32.totalorder %s19, 0
      %p86 = por %p84, %p85
      %s87 = ssub.s32 %s21, %s28
      %p88 = scmp.eq.s32.totalorder %s87, 0
      %s90 = sadd.s32 %s89, 1
      %s91 = scalar_select %p88, %s89, %s90
      %p94 = pneg %p88
      %p95 = scmp.eq.s32.totalorder %s13, 1
      %p96 = por %p94, %p95
      %p97 = scmp.ne.s32.totalorder %s89, %s92
      %p98 = scmp.eq.s32.totalorder %s13, 0
      %p99 = por %p97, %p98
      %p100 = scmp.ne.s32.totalorder %s89, %s92
      %p101 = scmp.eq.s32.totalorder %s18, 1
      %p102 = por %p100, %p101
      %p103 = scmp.ne.s32.totalorder %s92, %s93
      %p104 = scmp.eq.s32.totalorder %s18, 0
      %p105 = por %p103, %p104
      %p106 = scmp.ne.s32.totalorder %s92, %s93
      %p107 = scmp.eq.s32.totalorder %s19, 1
      %p108 = por %p106, %p107
      %p110 = scmp.ne.s32.totalorder %s93, %s109
      %p111 = scmp.eq.s32.totalorder %s19, 0
      %p112 = por %p110, %p111
      %s113 = ssub.s32 %s21, %s28
      %p114 = scmp.eq.s32.totalorder %s113, 0
      %s116 = sadd.s32 %s115, 1
      %s117 = scalar_select %p114, %s115, %s116
      %p120 = pneg %p114
      %p121 = scmp.eq.s32.totalorder %s13, 1
      %p122 = por %p120, %p121
      %p123 = scmp.ne.s32.totalorder %s115, %s118
      %p124 = scmp.eq.s32.totalorder %s13, 0
      %p125 = por %p123, %p124
      %p126 = scmp.ne.s32.totalorder %s115, %s118
      %p127 = scmp.eq.s32.totalorder %s18, 1
      %p128 = por %p126, %p127
      %p129 = scmp.ne.s32.totalorder %s118, %s119
      %p130 = scmp.eq.s32.totalorder %s18, 0
      %p131 = por %p129, %p130
      %p132 = scmp.ne.s32.totalorder %s118, %s119
      %p133 = scmp.eq.s32.totalorder %s19, 1
      %p134 = por %p132, %p133
      %p136 = scmp.ne.s32.totalorder %s119, %s135
      %p137 = scmp.eq.s32.totalorder %s19, 0
      %p138 = por %p136, %p137
      %s139 = ssub.s32 %s20, %s32
      %s140 = ssub.s32 %s21, %s28
      %s141 = sor.u32 %s139, %s140
      %p142 = scmp.eq.s32.totalorder %s141, 0
      %s144 = sadd.s32 %s143, 1
      %s145 = scalar_select %p142, %s143, %s144
      %p148 = pneg %p142
      %p149 = scmp.eq.s32.totalorder %s13, 1
      %p150 = por %p148, %p149
      %p151 = scmp.ne.s32.totalorder %s143, %s146
      %p152 = scmp.eq.s32.totalorder %s13, 0
      %p153 = por %p151, %p152
      %p154 = scmp.ne.s32.totalorder %s143, %s146
      %p155 = scmp.eq.s32.totalorder %s18, 1
      %p156 = por %p154, %p155
      %p157 = scmp.ne.s32.totalorder %s146, %s147
      %p158 = scmp.eq.s32.totalorder %s18, 0
      %p159 = por %p157, %p158
      %p160 = scmp.ne.s32.totalorder %s146, %s147
      %p161 = scmp.eq.s32.totalorder %s19, 1
      %p162 = por %p160, %p161
      %p164 = scmp.ne.s32.totalorder %s147, %s163
      %p165 = scmp.eq.s32.totalorder %s19, 0
      %p166 = por %p164, %p165
      %p167 = scmp.le.s32.totalorder 1, %s13
      %p168 = scmp.lt.s32.totalorder %s13, 3
      %p169 = pnand %p167, %p168
      %p170 = pneg %p169
      // Predicated region
      $region9: #{tpu_custom_call.1} parent=5 // pred_check
        _
      $region10: #{tpu_custom_call.1} parent=5 // pred_check_branch
        %172 = sbr.rel (%p169) target = $region12
      $region11: #{tpu_custom_call.1} parent=5 // pred_region
        %s173 = ssub.s32 %s13, 1
        // Predicated region
        $region13: #{tpu_custom_call.1} parent=11 // pred_check
          %p174 = pneg %p79
        $region14: #{tpu_custom_call.1} parent=11 // pred_check_branch
          %176 = sbr.rel (%p174) target = $region16
        $region15: #{tpu_custom_call.1} parent=11 // pred_region
          %s177 = smul.u32 2, %s22
          %p178 = scmp.lt.s32.totalorder %s177, 1
          %s179 = scalar_select %p178, %s177, 1
          %s180 = scalar_lea.vmem %s1, %s179
          %s181 = smul.u32 2, %s22
        $region16: #{tpu_custom_call.1} parent=11 // pred_fallthru
          _
      $region12: #{tpu_custom_call.1} parent=5 // pred_fallthru
        _
      %p182 = scmp.lt.s32.totalorder %s13, 2
      // Predicated region
      $region17: #{tpu_custom_call.1} parent=5 // pred_check
        %p183 = pneg %p182
      $region18: #{tpu_custom_call.1} parent=5 // pred_check_branch
        %185 = sbr.rel (%p183) target = $region20
      $region19: #{tpu_custom_call.1} parent=5 // pred_region
        // Predicated region
        $region21: #{tpu_custom_call.1} parent=19 // pred_check
          %p186 = pneg %p47
        $region22: #{tpu_custom_call.1} parent=19 // pred_check_branch
          %188 = sbr.rel (%p186) target = $region24
        $region23: #{tpu_custom_call.1} parent=19 // pred_region
          %s189 = sand.u32 %s37, 1
          %s190 = sand.u32 %s37, 1
          %s191 = smul.addr %s190, 4
          %s192 = scalar_lea.vmem [#allocation2], %s191
          %s193 = smul.u32 2, %s20
          %s194 = smul.addr %s193, 2
          %s195 = sadd.s32 %s21, %s194
          %s196 = smul.addr %s195, 2
          %s197 = scalar_lea.vmem %s0, %s196
          // Predicated region
          $region25: #{tpu_custom_call.1} parent=23 // pred_check
            _
          $region26: #{tpu_custom_call.1} parent=23 // pred_check_branch
            %199 = sbr.rel (0) target = $region28
          $region27: #{tpu_custom_call.1} parent=23 // pred_region
            // Predicated region
            $region29: #{tpu_custom_call.1} parent=27 // pred_check
              _
            $region30: #{tpu_custom_call.1} parent=27 // pred_check_branch
              %201 = sbr.rel target = $region32
            $region31: #{tpu_custom_call.1} parent=27 // pred_region
              // Predicated region
              $region44: #{tpu_custom_call.1} parent=31 // pred_check
                _
              $region45: #{tpu_custom_call.1} parent=31 // pred_check_branch
                %218 = sbr.rel (0) target = $region47
              $region46: #{tpu_custom_call.1} parent=31 // pred_region
                loop: start=0, step=1, limit=1
                $region48: #{tpu_custom_call.1} parent=46 // loop_pre_header
                  _
                $region49: #{tpu_custom_call.1} parent=46 // loop_header
                  %s221 = sphi 0, %s225
                  %p222 = scmp.ge.s32.totalorder %s221, 1
                  %s226 = sphi %s197, %s197
                  %s227 = sphi %s192, %s192
                $region50: #{tpu_custom_call.1} parent=46 // loop_header_branch
                  %224 = sbr.rel (%p222) target = $region54
                $region51: #{tpu_custom_call.1} parent=46 // loop_body
                  %v228 = vld [vmem:[%s226] sm:$0x3]
                  %229 = vst [vmem:[%s227] sm:$0x3] %v228
                  %v230 = vld [vmem:[%s226 + $0x4] sm:$0x3]
                  %231 = vst [vmem:[%s227 + $0x2] sm:$0x3] %v230
                $region52: #{tpu_custom_call.1} parent=46 // loop_footer
                  %s225 = sadd.s32 1, %s221
                $region53: #{tpu_custom_call.1} parent=46 // loop_footer_branch
                  %220 = sbr.rel target = $region49
                $region54: #{tpu_custom_call.1} parent=46 // loop_exit
                  _
              $region47: #{tpu_custom_call.1} parent=31 // pred_fallthru
                _
            $region32: #{tpu_custom_call.1} parent=27 // pred_fallthru
              _
            // Predicated region
            $region33: #{tpu_custom_call.1} parent=27 // pred_check
              _
            $region34: #{tpu_custom_call.1} parent=27 // pred_check_branch
              %203 = sbr.rel (0) target = $region36
            $region35: #{tpu_custom_call.1} parent=27 // pred_region
              loop: start=0, step=1, limit=1
              $region37: #{tpu_custom_call.1} parent=35 // loop_pre_header
                _
              $region38: #{tpu_custom_call.1} parent=35 // loop_header
                %s206 = sphi 0, %s210
                %p207 = scmp.ge.s32.totalorder %s206, 1
                %s211 = sphi %s197, %s197
                %s212 = sphi %s192, %s192
              $region39: #{tpu_custom_call.1} parent=35 // loop_header_branch
                %209 = sbr.rel (%p207) target = $region43
              $region40: #{tpu_custom_call.1} parent=35 // loop_body
                %v213 = vld [vmem:[%s211] sm:$0x3]
                %214 = vst [vmem:[%s212] sm:$0x3] %v213
                %v215 = vld [vmem:[%s211 + $0x4] sm:$0x3]
                %216 = vst [vmem:[%s212 + $0x2] sm:$0x3] %v215
              $region41: #{tpu_custom_call.1} parent=35 // loop_footer
                %s210 = sadd.s32 1, %s206
              $region42: #{tpu_custom_call.1} parent=35 // loop_footer_branch
                %205 = sbr.rel target = $region38
              $region43: #{tpu_custom_call.1} parent=35 // loop_exit
                _
            $region36: #{tpu_custom_call.1} parent=27 // pred_fallthru
              _
          $region28: #{tpu_custom_call.1} parent=23 // pred_fallthru
            _
          %232 = vnop
        $region24: #{tpu_custom_call.1} parent=19 // pred_fallthru
          _
        // Predicated region
        $region55: #{tpu_custom_call.1} parent=19 // pred_check
          %p233 = pneg %p99
        $region56: #{tpu_custom_call.1} parent=19 // pred_check_branch
          %235 = sbr.rel (%p233) target = $region58
        $region57: #{tpu_custom_call.1} parent=19 // pred_region
          %p236 = scmp.lt.s32.totalorder %s21, 1
          %s237 = scalar_select %p236, %s21, 1
          %s238 = smul.addr %s237, 2
          %s239 = scalar_lea.vmem %s2, %s238
        $region58: #{tpu_custom_call.1} parent=19 // pred_fallthru
          _
        // Predicated region
        $region59: #{tpu_custom_call.1} parent=19 // pred_check
          %p240 = pneg %p125
        $region60: #{tpu_custom_call.1} parent=19 // pred_check_branch
          %242 = sbr.rel (%p240) target = $region62
        $region61: #{tpu_custom_call.1} parent=19 // pred_region
          %p243 = scmp.lt.s32.totalorder %s21, 1
          %s244 = scalar_select %p243, %s21, 1
          %s245 = smul.addr %s244, 2
          %s246 = scalar_lea.vmem %s3, %s245
        $region62: #{tpu_custom_call.1} parent=19 // pred_fallthru
          _
      $region20: #{tpu_custom_call.1} parent=5 // pred_fallthru
        _
      %p247 = scmp.le.s32.totalorder 1, %s13
      %p248 = scmp.lt.s32.totalorder %s13, 3
      %p249 = pnand %p247, %p248
      %p250 = pneg %p249
      // Predicated region
      $region63: #{tpu_custom_call.1} parent=5 // pred_check
        _
      $region64: #{tpu_custom_call.1} parent=5 // pred_check_branch
        %252 = sbr.rel (%p249) target = $region66
      $region65: #{tpu_custom_call.1} parent=5 // pred_region
        %s253 = ssub.s32 %s13, 1
        %s254 = sand.u32 %s40, 1
        %s255 = sand.u32 %s40, 1
        %s256 = smul.addr %s255, 4
        %s257 = scalar_lea.vmem [#allocation2], %s256
        // Predicated region
        $region67: #{tpu_custom_call.1} parent=65 // pred_check
          %p258 = pneg %p53
        $region68: #{tpu_custom_call.1} parent=65 // pred_check_branch
          %260 = sbr.rel (%p258) target = $region70
        $region69: #{tpu_custom_call.1} parent=65 // pred_region
          _
        $region70: #{tpu_custom_call.1} parent=65 // pred_fallthru
          _
        %s261 = sand.u32 %s40, 1
        %s262 = sand.u32 %s40, 1
        %s263 = smul.addr %s262, 4
        %s264 = scalar_lea.vmem [#allocation2], %s263
        %p265 = pneg %p53
        %p266 = pneg %p50
        %s267 = smul.u32 2, %s22
        %p268 = scmp.lt.s32.totalorder %s267, 1
        %s269 = scalar_select %p268, %s267, 1
        %s270 = scalar_lea.vmem %s1, %s269
        %p271 = pneg %p79
        %p272 = pneg %p76
        %p273 = scmp.lt.s32.totalorder %s23, 1
        %s274 = scalar_select %p273, %s23, 1
        %s275 = smul.addr %s274, 2
        %s276 = scalar_lea.vmem %s2, %s275
        %p277 = pneg %p105
        %p278 = pneg %p102
        %p279 = scmp.lt.s32.totalorder %s23, 1
        %s280 = scalar_select %p279, %s23, 1
        %s281 = smul.addr %s280, 2
        %s282 = scalar_lea.vmem %s3, %s281
        %p283 = pneg %p131
        %p284 = pneg %p128
        %p285 = pneg %p159
        %p286 = pneg %p156
        %s287 = sand.u32 %s146, 1
        %s288 = scalar_lea.sflag [#allocation4], %s287
        %s289 = sand.u32 %s146, 1
        %s290 = smul.addr %s289, 4
        %s291 = scalar_lea.vmem [#allocation3], %s290
        %s292 = smul.u32 2, %s22
        %s293 = smul.u32 2, %s22
        %p294 = scmp.lt.s32.totalorder %s293, 1
        %s295 = scalar_select %p294, %s293, 1
        %s296 = scalar_lea.vmem %s1, %s295
        %s297 = smul.u32 2, %s22
        %p298 = scmp.lt.s32.totalorder %s23, 1
        %s299 = scalar_select %p298, %s23, 1
        %s300 = smul.addr %s299, 2
        %s301 = scalar_lea.vmem %s2, %s300
        %p302 = scmp.lt.s32.totalorder %s23, 1
        %s303 = scalar_select %p302, %s23, 1
        %s304 = smul.addr %s303, 2
        %s305 = scalar_lea.vmem %s3, %s304
        %s306 = smul.u32 2, %s22
        %v307 = vld [vmem:[%s257] sm:$0x3]
        %v308 = vld [vmem:[%s257 + $0x2] sm:$0x3]
        %v309 = vld [vmem:[%s296] sm:$0x1]
        %v310 = vld [vmem:[%s296 + $0x1] sm:$0x1]
        %v313 = vlaneseq
        %v314 = vshrl.u32 %v313, 7
        %v315 = vsub.s32 0, %v314
        %v316 = vrot.slane %v309, %v315
        %v317 = vlaneseq
        %v318 = vshrl.u32 %v317, 7
        %v319 = vsub.s32 0, %v318
        %v320 = vrot.slane %v310, %v319
        %v323 = vmul.f32 %v307, %v316
        %v324 = vmul.f32 %v308, %v320
        %vm325 = vcmask 1040384
        %v326 = vsel %vm325, %v309, 0.0
        %327 = vadd.xlane.f32.xlu0 %v326
        %v328 = vpop.xlane.xlu0 %327
        %v329 = vsel %vm325, %v310, 0.0
        %330 = vadd.xlane.f32.xlu0 %v329
        %v331 = vpop.xlane.xlu0 %330
        %v332 = vmul.f32 %v328, 2.0
        %v333 = vmul.f32 %v331, 2.0
        %v334 = vrcp.pop %v332
        %v335 = vmul.f32 1.0, %v334
        %v336 = vrcp.pop %v333
        %v337 = vmul.f32 1.0, %v336
        %vm338 = vcmask 1041408
        %v339 = vsel %vm338, %v323, 0.0
        %340 = vadd.xlane.f32.xlu0 %v339
        %v341 = vpop.xlane.xlu0 %340
        %v342 = vrot.slane %v341, 4
        %v343 = vadd.f32 %v341, %v342
        %v344 = vrot.slane %v343, 2
        %v345 = vadd.f32 %v343, %v344
        %v346 = vrot.slane %v345, 1
        %v347 = vadd.f32 %v345, %v346
        %v348 = vsel %vm338, %v324, 0.0
        %349 = vadd.xlane.f32.xlu0 %v348
        %v350 = vpop.xlane.xlu0 %349
        %v351 = vrot.slane %v350, 4
        %v352 = vadd.f32 %v350, %v351
        %v353 = vrot.slane %v352, 2
        %v354 = vadd.f32 %v352, %v353
        %v355 = vrot.slane %v354, 1
        %v356 = vadd.f32 %v354, %v355
        %v357 = vmul.f32 %v347, %v335
        %v358 = vmul.f32 %v356, %v337
        %v359 = vlaneseq
        %v360 = vshrl.u32 %v359, 7
        %v361 = vsub.s32 0, %v360
        %v362 = vrot.slane %v357, %v361
        %v363 = vlaneseq
        %v364 = vshrl.u32 %v363, 7
        %v365 = vsub.s32 0, %v364
        %v366 = vrot.slane %v358, %v365
        %v367 = vsub.f32 %v323, %v362
        %v368 = vsub.f32 %v324, %v366
        %v369 = vmul.f32 %v367, %v367
        %v370 = vmul.f32 %v368, %v368
        %v371 = vmul.f32 %v369, %v316
        %v372 = vmul.f32 %v370, %v320
        %v373 = vsel %vm338, %v371, 0.0
        %374 = vadd.xlane.f32.xlu0 %v373
        %v375 = vpop.xlane.xlu0 %374
        %v376 = vrot.slane %v375, 4
        %v377 = vadd.f32 %v375, %v376
        %v378 = vrot.slane %v377, 2
        %v379 = vadd.f32 %v377, %v378
        %v380 = vrot.slane %v379, 1
        %v381 = vadd.f32 %v379, %v380
        %v382 = vsel %vm338, %v372, 0.0
        %383 = vadd.xlane.f32.xlu0 %v382
        %v384 = vpop.xlane.xlu0 %383
        %v385 = vrot.slane %v384, 4
        %v386 = vadd.f32 %v384, %v385
        %v387 = vrot.slane %v386, 2
        %v388 = vadd.f32 %v386, %v387
        %v389 = vrot.slane %v388, 1
        %v390 = vadd.f32 %v388, %v389
        %v391 = vmul.f32 %v381, %v335
        %v392 = vmul.f32 %v390, %v337
        %v393 = vadd.f32 %v391, 1e-05
        %v394 = vadd.f32 %v392, 1e-05
        %v395 = vrsqrt.pop %v393
        %v396 = vrsqrt.pop %v394
        %v397 = vld [vmem:[%s301] sm:$0x3]
        %v398 = vld [vmem:[%s305] sm:$0x3]
        %v399 = vlaneseq
        %v400 = vshrl.u32 %v399, 7
        %v401 = vsub.s32 0, %v400
        %v402 = vrot.slane %v395, %v401
        %v403 = vlaneseq
        %v404 = vshrl.u32 %v403, 7
        %v405 = vsub.s32 0, %v404
        %v406 = vrot.slane %v396, %v405
        %v407 = vmul.f32 %v397, %v402
        %v408 = vmul.f32 %v397, %v406
        %v409 = vmul.f32 %v362, %v407
        %v410 = vmul.f32 %v366, %v408
        %v411 = vsub.f32 %v398, %v409
        %v412 = vsub.f32 %v398, %v410
        %414 = vset.pattern.permute.xlu0 0
        %415 = vperm.xlu0 %414, %v407
        %v416 = vpop.permute.xlu0 %415
        %419 = vset.pattern.permute.xlu0 0
        %420 = vperm.xlu0 %419, %v408
        %v421 = vpop.permute.xlu0 %420
        %v423 = vmul.f32 %v323, %v416
        %v424 = vmul.f32 %v324, %v421
        %426 = vset.pattern.permute.xlu0 0
        %427 = vperm.xlu0 %426, %v411
        %v428 = vpop.permute.xlu0 %427
        %431 = vset.pattern.permute.xlu0 0
        %432 = vperm.xlu0 %431, %v412
        %v433 = vpop.permute.xlu0 %432
        %v435 = vadd.f32 %v423, %v428
        %v436 = vadd.f32 %v424, %v433
        %437 = vst [vmem:[%s291] sm:$0x3] %v435
        %438 = vst [vmem:[%s291 + $0x2] sm:$0x3] %v436
        %s439 = sand.u32 %s146, 1
        %s440 = scalar_lea.sflag [#allocation4], %s439
        %s441 = sand.u32 %s146, 1
        %s442 = smul.addr %s441, 4
        %s443 = scalar_lea.vmem [#allocation3], %s442
        // Predicated region
        $region71: #{tpu_custom_call.1} parent=65 // pred_check
          %p444 = pneg %p156
        $region72: #{tpu_custom_call.1} parent=65 // pred_check_branch
          %446 = sbr.rel (%p444) target = $region74
        $region73: #{tpu_custom_call.1} parent=65 // pred_region
          %s447 = smul.u32 2, %s22
          %s449 = ssub.s32 64, 64
          %450 = vsyncadd %s440, %s449
          %s451 = smul.addr %s447, 2
          %s452 = sadd.s32 %s23, %s451
          %s453 = smul.addr %s452, 32
          %s454 = scalar_lea.hbm %s4, %s453
          %s455 = sshll.u32 %s443, 4
          %s456 = int_to_ptr.vmem [resolvable:$true] %s455
          %461 = dma.vmem_to_hbm [thread:$0]  %s456, 64, %s454, %s440, 32, 64, 2
        $region74: #{tpu_custom_call.1} parent=65 // pred_fallthru
          _
      $region66: #{tpu_custom_call.1} parent=5 // pred_fallthru
        _
      %p462 = scmp.le.s32.totalorder 2, %s13
      // Predicated region
      $region75: #{tpu_custom_call.1} parent=5 // pred_check
        %p463 = pneg %p462
      $region76: #{tpu_custom_call.1} parent=5 // pred_check_branch
        %465 = sbr.rel (%p463) target = $region78
      $region77: #{tpu_custom_call.1} parent=5 // pred_region
        %s466 = ssub.s32 %s13, 2
        // Predicated region
        $region79: #{tpu_custom_call.1} parent=77 // pred_check
          %p467 = pneg %p162
        $region80: #{tpu_custom_call.1} parent=77 // pred_check_branch
          %469 = sbr.rel (%p467) target = $region82
        $region81: #{tpu_custom_call.1} parent=77 // pred_region
          %s470 = sand.u32 %s147, 1
          %s471 = scalar_lea.sflag [#allocation4], %s470
          %s472 = sand.u32 %s147, 1
          %s473 = smul.addr %s472, 4
          %s474 = scalar_lea.vmem [#allocation3], %s473
          %475 = dma.done %s471, 64
        $region82: #{tpu_custom_call.1} parent=77 // pred_fallthru
          _
      $region78: #{tpu_custom_call.1} parent=5 // pred_fallthru
        _
    $region6: #{tpu_custom_call.1} parent=1 // loop_footer
      %s17 = sadd.s32 1, %s13
    $region7: #{tpu_custom_call.1} parent=1 // loop_footer_branch
      %12 = sbr.rel target = $region3
    $region8: #{tpu_custom_call.1} parent=1 // loop_exit
      _
    %476 = vsyncpa [#allocation4], 1
    %s477 = scalar_lea.sflag [#allocation4], 1
    %478 = vsyncpa %s477, 1

</llo_original>
